<compile_context>
chip_gen: v7x
topology: tpu7x:2x2x1
jax: 0.10.0
libtpu: 0.0.40
codegen_flags: <defaults>
</compile_context>

<pallas_src>
import functools

import jax
import jax.numpy as jnp
from jax import lax
from jax.experimental import pallas as pl
from jax.experimental.pallas import tpu as pltpu

LANES = 128
MAX_TILE_ROWS = 1024  # (1024,128) f32 tile = 512 KiB; x2-3 inputs x2 buffers ~= 2-3 MiB


def _round_up(x, m):
    return ((x + m - 1) // m) * m


# ---------------------------------------------------------------------------
# Data term (MSE-sum / SmoothL1-sum), optionally fused with the mask.
# ---------------------------------------------------------------------------
def _per_elem_loss(d, loss_type):
    if loss_type == "l2":                       # nn.MSELoss(reduction='sum')
        return d * d
    ad = jnp.abs(d)                             # nn.SmoothL1Loss(sum), beta=1.0
    return jnp.where(ad < 1.0, 0.5 * d * d, ad - 0.5)


def _make_data_kernel(loss_type, masked, need_row_mask, row_block,
                      tiles_per_slice, total_rows):
    sub = row_block // 8

    def _row_valid():
        blk = pl.program_id(0) * tiles_per_slice + pl.program_id(1)
        rows = blk * row_block + lax.broadcasted_iota(
            jnp.int32, (row_block, LANES), 0)
        return rows < total_rows

    def _fold(x):  # (row_block,128) -> (1,8,128) vreg-wise partial sum (VPU adds only)
        return jnp.sum(x.reshape(sub, 8, LANES), axis=0).reshape(1, 8, LANES)

    if masked:
        def kernel(p_ref, t_ref, m_ref, loss_ref, msum_ref):
            @pl.when(pl.program_id(1) == 0)
            def _():
                loss_ref[...] = jnp.zeros_like(loss_ref)
                msum_ref[...] = jnp.zeros_like(msum_ref)

            p = p_ref[...].astype(jnp.float32)
            t = t_ref[...].astype(jnp.float32)
            m = m_ref[...].astype(jnp.float32)
            le = _per_elem_loss((p - t) * m, loss_type)   # == loss(p*m, t*m)
            if need_row_mask:
                valid = _row_valid()
                le = jnp.where(valid, le, 0.0)
                m = jnp.where(valid, m, 0.0)
            loss_ref[...] += _fold(le)
            msum_ref[...] += _fold(m)

        return kernel

    def kernel(p_ref, t_ref, loss_ref):
        @pl.when(pl.program_id(1) == 0)
        def _():
            loss_ref[...] = jnp.zeros_like(loss_ref)

        le = _per_elem_loss(
            p_ref[...].astype(jnp.float32) - t_ref[...].astype(jnp.float32),
            loss_type)
        if need_row_mask:
            le = jnp.where(_row_valid(), le, 0.0)
        loss_ref[...] += _fold(le)

    return kernel


def _as_lane_matrix(x):
    """Flatten to (rows, 128). Free reshape when numel % 128 == 0 (the common
    case); otherwise a < 128-element zero pad (zeros contribute 0 everywhere)."""
    x = x.reshape(-1)
    pad = (-x.shape[0]) % LANES
    if pad:
        x = jnp.pad(x, (0, pad))
    return x.reshape(-1, LANES)


def _data_grid_params(rows):
    row_block = min(MAX_TILE_ROWS, _round_up(rows, 8))
    tiles_total = -(-rows // row_block)
    # 2 "parallel" slices -> one per v7x TensorCore.  Only when the split is
    # exact, so no fully out-of-bounds block is ever generated.
    num_slices = 2 if (tiles_total >= 2 and tiles_total % 2 == 0) else 1
    tiles_per_slice = tiles_total // num_slices
    need_row_mask = tiles_total * row_block != rows
    return row_block, num_slices, tiles_per_slice, need_row_mask


@functools.partial(jax.jit, static_argnames=("loss_type",))
def _data_loss_sum(predict, target, *, loss_type):
    p2 = _as_lane_matrix(predict)
    t2 = _as_lane_matrix(target)
    rows = p2.shape[0]
    row_block, num_slices, tps, need_row_mask = _data_grid_params(rows)

    in_spec = pl.BlockSpec((row_block, LANES), lambda c, i: (c * tps + i, 0))
    out_spec = pl.BlockSpec((1, 8, LANES), lambda c, i: (c, 0, 0))
    partial = pl.pallas_call(
        _make_data_kernel(loss_type, False, need_row_mask, row_block, tps, rows),
        out_shape=jax.ShapeDtypeStruct((num_slices, 8, LANES), jnp.float32),
        grid=(num_slices, tps),
        in_specs=[in_spec, in_spec],
        out_specs=out_spec,
        compiler_params=pltpu.CompilerParams(
            dimension_semantics=("parallel", "arbitrary")),
    )(p2, t2)
    return jnp.sum(partial)


@functools.partial(jax.jit, static_argnames=("loss_type",))
def _masked_data_loss_sums(predict, target, mask, *, loss_type):
    """Returns (sum of per-elem loss on (p*m, t*m), sum of channel-broadcast mask)."""
    if mask.shape != predict.shape:
        mask = jnp.broadcast_to(mask, predict.shape)
    p2 = _as_lane_matrix(predict)
    t2 = _as_lane_matrix(target)
    m2 = _as_lane_matrix(mask)
    rows = p2.shape[0]
    row_block, num_slices, tps, need_row_mask = _data_grid_params(rows)

    in_spec = pl.BlockSpec((row_block, LANES), lambda c, i: (c * tps + i, 0))
    out_spec = pl.BlockSpec((1, 8, LANES), lambda c, i: (c, 0, 0))
    out_sd = jax.ShapeDtypeStruct((num_slices, 8, LANES), jnp.float32)
    loss_p, msum_p = pl.pallas_call(
        _make_data_kernel(loss_type, True, need_row_mask, row_block, tps, rows),
        out_shape=(out_sd, out_sd),
        grid=(num_slices, tps),
        in_specs=[in_spec, in_spec, in_spec],
        out_specs=(out_spec, out_spec),
        compiler_params=pltpu.CompilerParams(
            dimension_semantics=("parallel", "arbitrary")),
    )(p2, t2, m2)
    return jnp.sum(loss_p), jnp.sum(msum_p)


# ---------------------------------------------------------------------------
# TV-L1 regularizer: sum of |forward differences| along D, H, W (optionally
# weighted by the mask), one (b, c) volume of shape (D, H, W) per grid step.
# ---------------------------------------------------------------------------
def _make_tv_kernel(masked, Dd, Hh, Ww):
    def _terms(x, m):
        total = jnp.float32(0.0)
        if Dd > 1:
            t = jnp.abs(x[:-1, :, :] - x[1:, :, :])
            if masked:
                t = t * m[:-1, :, :]
            total = total + jnp.sum(t)
        if Hh > 1:
            t = jnp.abs(x[:, :-1, :] - x[:, 1:, :])
            if masked:
                t = t * m[:, :-1, :]
            total = total + jnp.sum(t)
        if Ww > 1:
            t = jnp.abs(x[:, :, :-1] - x[:, :, 1:])
            if masked:
                t = t * m[:, :, :-1]
            total = total + jnp.sum(t)
        return total

    if masked:
        def kernel(x_ref, m_ref, o_ref):
            @pl.when(pl.program_id(0) == 0)
            def _():
                o_ref[...] = jnp.zeros_like(o_ref)
            o_ref[0, 0] += _terms(x_ref[0].astype(jnp.float32),
                                  m_ref[0].astype(jnp.float32))
        return kernel

    def kernel(x_ref, o_ref):
        @pl.when(pl.program_id(0) == 0)
        def _():
            o_ref[...] = jnp.zeros_like(o_ref)
        o_ref[0, 0] += _terms(x_ref[0].astype(jnp.float32), None)

    return kernel


def _tv_pallas(x, mask):
    B, C, Dd, Hh, Ww = x.shape
    if Dd <= 1 and Hh <= 1 and Ww <= 1:
        return jnp.float32(0.0)
    xr = x.reshape(B * C, Dd, Hh, Ww)
    vol_spec = pl.BlockSpec((1, Dd, Hh, Ww), lambda i: (i, 0, 0, 0))
    # TODO(synk): tile the D axis with a carried previous-plane scratch if a
    # single D*H*W volume ever exceeds VMEM.
    if mask is None:
        operands, in_specs = (xr,), [vol_spec]
    else:
        operands = (xr, mask.reshape(B * C, Dd, Hh, Ww))
        in_specs = [vol_spec, vol_spec]
    out = pl.pallas_call(
        _make_tv_kernel(mask is not None, Dd, Hh, Ww),
        out_shape=jax.ShapeDtypeStruct((1, 1), jnp.float32),
        grid=(B * C,),
        in_specs=in_specs,
        out_specs=pl.BlockSpec((1, 1), lambda i: (0, 0)),
        compiler_params=pltpu.CompilerParams(dimension_semantics=("arbitrary",)),
    )(*operands)
    return out[0, 0]


@jax.jit
def _tv_l1_sum(x):
    return _tv_pallas(x, None)


@jax.jit
def _tv_l1_sum_masked(x, mask):
    if mask.shape != x.shape:
        mask = jnp.broadcast_to(mask, x.shape)
    return _tv_pallas(x, mask)


# ---------------------------------------------------------------------------
# DVCLoss wrapper (forward only)
# ---------------------------------------------------------------------------
class DVCLoss:
    """JAX/Pallas port of models/criterion.py::DVCLoss forward."""

    def __init__(self, config,
                 margin_predict=((0, 0, 0), (0, 0, 0)),
                 margin_target=((0, 0, 0), (0, 0, 0))):
        self.loss_type = str(config["loss_type"]).lower()
        assert self.loss_type in ("l1", "l2")
        self.margin_p_start, self.margin_p_end = margin_predict
        self.margin_t_start, self.margin_t_end = margin_target
        self.tv_weight = (float(config["loss_tvl1_weight"])
                          if "loss_tvl1_weight" in config else None)

    @staticmethod
    def _crop(x, start, end):
        _, _, nd, nh, nw = x.shape
        return x[:, :, start[0]:nd - end[0], start[1]:nh - end[1],
                 start[2]:nw - end[2]]

    def __call__(self, predict, target, mask=None):
        predict_roi = self._crop(predict, self.margin_p_start, self.margin_p_end)
        target_roi = self._crop(target, self.margin_t_start, self.margin_t_end)
        assert predict_roi.shape == target_roi.shape
        _, C, Dd, Hh, Ww = predict_roi.shape

        if mask is None:
            count = float(C * Dd * Hh * Ww)   # reference: channels * spatial, no batch
            loss_data = _data_loss_sum(predict_roi, target_roi,
                                       loss_type=self.loss_type) / count
            loss_reg = None
            if self.tv_weight is not None:
                loss_reg = self.tv_weight * _tv_l1_sum(predict_roi) / count
        else:
            mask_roi = self._crop(mask, self.margin_p_start, self.margin_p_end)
            loss_sum, mask_sum = _masked_data_loss_sums(
                predict_roi, target_roi, mask_roi, loss_type=self.loss_type)
            # count = sum(mask_roi) * (nc_p / nc_m) == sum of the channel-broadcast
            # mask, which the kernel accumulates for free in the same pass.
            count = mask_sum
            loss_data = loss_sum / count
            loss_reg = None
            if self.tv_weight is not None:
                loss_reg = (self.tv_weight
                            * _tv_l1_sum_masked(predict_roi, mask_roi) / count)

        if loss_reg is not None:
            loss_info = [float(loss_data), float(loss_reg)]
            return loss_data + loss_reg, loss_info
        loss_info = [float(loss_data), 0.0]
        return loss_data + 0.0, loss_info


# ---------------------------------------------------------------------------
# Pure-JAX reference (mirrors the PyTorch module) + demo
# ---------------------------------------------------------------------------
def _ref_tv(x, m):
    s = jnp.sum(jnp.abs(x[:, :, :-1] - x[:, :, 1:]) * m[:, :, :-1])
    s = s + jnp.sum(jnp.abs(x[:, :, :, :-1] - x[:, :, :, 1:]) * m[:, :, :, :-1])
    s = s + jnp.sum(jnp.abs(x[..., :-1] - x[..., 1:]) * m[..., :-1])
    return s


def _ref_forward(predict, target, mask, loss_type, tv_weight,
                 margin_p=((0, 0, 0), (0, 0, 0)),
                 margin_t=((0, 0, 0), (0, 0, 0))):
    (ps, pe), (ts, te) = margin_p, margin_t
    _, C, nd, nh, nw = predict.shape
    pr = predict[:, :, ps[0]:nd - pe[0], ps[1]:nh - pe[1], ps[2]:nw - pe[2]]
    _, Ct, nd2, nh2, nw2 = target.shape
    tr = target[:, :, ts[0]:nd2 - te[0], ts[1]:nh2 - te[1], ts[2]:nw2 - te[2]]
    if mask is None:
        count = float(pr.shape[1] * pr.shape[2] * pr.shape[3] * pr.shape[4])
        loss_data = jnp.sum(_per_elem_loss(pr - tr, loss_type)) / count
        loss_reg = (tv_weight * _ref_tv(pr, jnp.ones_like(pr)) / count
                    if tv_weight is not None else 0.0)
    else:
        nc_m = mask.shape[1]
        mask_factor = C / nc_m if C == Ct else 1.0
        mr = mask[:, :, ps[0]:nd - pe[0], ps[1]:nh - pe[1], ps[2]:nw - pe[2]]
        mb = jnp.broadcast_to(mr, pr.shape)
        count = jnp.sum(mr) * mask_factor
        loss_data = jnp.sum(_per_elem_loss(pr * mb - tr * mb, loss_type)) / count
        loss_reg = (tv_weight * _ref_tv(pr, mb) / count
                    if tv_weight is not None else 0.0)
    return loss_data + loss_reg


if __name__ == "__main__":
    key = jax.random.PRNGKey(0)
    k1, k2, k3, k4, k5 = jax.random.split(key, 5)

    ok = True

    def check(name, got, want, rtol=2e-4, atol=1e-3):
        global ok
        if not jnp.allclose(got, want, rtol=rtol, atol=atol):
            ok = False
            print(f"MISMATCH {name}: got {got}, want {want}")

    # --- main case: (B, C, D, H, W) = (2, 4, 16, 16, 16), TV reg, with/without mask
    B, C, D, H, W = 2, 4, 16, 16, 16
    predict = jax.random.normal(k1, (B, C, D, H, W), jnp.float32) * 2.0
    target = jax.random.normal(k2, (B, C, D, H, W), jnp.float32)
    mask = (jax.random.uniform(k3, (B, 1, D, H, W)) > 0.3).astype(jnp.float32)

    for lt in ("l2", "l1"):
        crit = DVCLoss({"loss_type": lt, "loss_tvl1_weight": 0.1})
        total, info = crit(predict, target)
        total = jax.block_until_ready(total)
        check(f"{lt}/no-mask", total, _ref_forward(predict, target, None, lt, 0.1))

        total_m, info_m = crit(predict, target, mask)
        total_m = jax.block_until_ready(total_m)
        check(f"{lt}/mask", total_m, _ref_forward(predict, target, mask, lt, 0.1))

    # --- ROI margins: exercises the unaligned-tail (small pad + in-kernel row mask)
    margins = ((1, 1, 1), (1, 1, 1))
    crit = DVCLoss({"loss_type": "l2", "loss_tvl1_weight": 0.05},
                   margin_predict=margins, margin_target=margins)
    total, _ = crit(predict, target)
    total = jax.block_until_ready(total)
    check("l2/margins", total,
          _ref_forward(predict, target, None, "l2", 0.05,
                       margin_p=margins, margin_t=margins))

    # --- larger case: exercises multi-tile accumulation + the 2-slice parallel axis
    pb = jax.random.normal(k4, (4, 4, 32, 32, 32), jnp.float32)
    tb = jax.random.normal(k5, (4, 4, 32, 32, 32), jnp.float32)
    crit = DVCLoss({"loss_type": "l2"})   # no TV weight -> loss_reg = 0.0
    total, info = crit(pb, tb)
    total = jax.block_until_ready(total)
    check("l2/big", total, _ref_forward(pb, tb, None, "l2", None))

    if ok:
        print("KERNEL_OK")
</pallas_src>

<mosaic_0001>
module attributes {stable_mosaic.version = 11 : i64} {
  func.func @kernel(%arg0: i32, %arg1: i32, %arg2: memref<256x128xf32, #tpu.memory_space<vmem>>, %arg3: memref<256x128xf32, #tpu.memory_space<vmem>>, %arg4: memref<1x8x128xf32, #tpu.memory_space<vmem>>) attributes {dimension_semantics = [#tpu.dimension_semantics<parallel>, #tpu.dimension_semantics<arbitrary>], iteration_bounds = array<i64: 1, 1>, scalar_prefetch = 0 : i64, scratch_operands = 0 : i64, tpu.core_type = #tpu.core_type<tc>, window_params = [{transform_indices = @transform_0, window_bounds = array<i64: 256, 128>}, {transform_indices = @transform_1, window_bounds = array<i64: 256, 128>}, {transform_indices = @transform_2, window_bounds = array<i64: 1, 8, 128>}]} {
    %c0_i32 = arith.constant 0 : i32
    %0 = arith.cmpi eq, %arg1, %c0_i32 : i32
    %1 = arith.extui %0 : i1 to i32
    %c0_i32_0 = arith.constant 0 : i32
    %2 = arith.cmpi ne, %1, %c0_i32_0 : i32
    scf.if %2 {
      %cst_10 = arith.constant 0.000000e+00 : f32
      %13 = vector.broadcast %cst_10 : f32 to vector<1x8x128xf32>
      %c0_11 = arith.constant 0 : index
      %c0_12 = arith.constant 0 : index
      %c0_13 = arith.constant 0 : index
      %14 = vector.load %arg4[%c0_11, %c0_12, %c0_13] : memref<1x8x128xf32, #tpu.memory_space<vmem>>, vector<1x8x128xf32>
      tpu.vector_store %arg4[%c0_11, %c0_12, %c0_13], %13 {strides = array<i32>} : memref<1x8x128xf32, #tpu.memory_space<vmem>>, vector<1x8x128xf32>,
    } else {
    }
    %c0 = arith.constant 0 : index
    %c0_1 = arith.constant 0 : index
    %3 = vector.load %arg2[%c0, %c0_1] : memref<256x128xf32, #tpu.memory_space<vmem>>, vector<256x128xf32>
    %c0_2 = arith.constant 0 : index
    %c0_3 = arith.constant 0 : index
    %4 = vector.load %arg3[%c0_2, %c0_3] : memref<256x128xf32, #tpu.memory_space<vmem>>, vector<256x128xf32>
    %5 = arith.subf %3, %4 : vector<256x128xf32>
    %6 = arith.mulf %5, %5 : vector<256x128xf32>
    %c0_4 = arith.constant 0 : index
    %c0_5 = arith.constant 0 : index
    %c0_6 = arith.constant 0 : index
    %7 = vector.load %arg4[%c0_4, %c0_5, %c0_6] : memref<1x8x128xf32, #tpu.memory_space<vmem>>, vector<1x8x128xf32>
    %8 = vector.shape_cast %6 : vector<256x128xf32> to vector<32x8x128xf32>
    %cst = arith.constant dense<0.000000e+00> : vector<8x128xf32>
    %9 = vector.multi_reduction <add>, %8, %cst [0] : vector<32x8x128xf32> to vector<8x128xf32>
    %10 = vector.shape_cast %9 : vector<8x128xf32> to vector<1x8x128xf32>
    %11 = arith.addf %7, %10 : vector<1x8x128xf32>
    %c0_7 = arith.constant 0 : index
    %c0_8 = arith.constant 0 : index
    %c0_9 = arith.constant 0 : index
    %12 = vector.load %arg4[%c0_7, %c0_8, %c0_9] : memref<1x8x128xf32, #tpu.memory_space<vmem>>, vector<1x8x128xf32>
    tpu.vector_store %arg4[%c0_7, %c0_8, %c0_9], %11 {strides = array<i32>} : memref<1x8x128xf32, #tpu.memory_space<vmem>>, vector<1x8x128xf32>,
    return
  }
  func.func @transform_0(%arg0: i32, %arg1: i32) -> (i32, i32) {
    %c1_i32 = arith.constant 1 : i32
    %0 = arith.muli %arg0, %c1_i32 : i32
    %1 = arith.addi %0, %arg1 : i32
    %c0_i32 = arith.constant 0 : i32
    %c0_i32_0 = arith.constant 0 : i32
    return %1, %c0_i32 : i32, i32
  }
  func.func @transform_1(%arg0: i32, %arg1: i32) -> (i32, i32) {
    %c1_i32 = arith.constant 1 : i32
    %0 = arith.muli %arg0, %c1_i32 : i32
    %1 = arith.addi %0, %arg1 : i32
    %c0_i32 = arith.constant 0 : i32
    %c0_i32_0 = arith.constant 0 : i32
    return %1, %c0_i32 : i32, i32
  }
  func.func @transform_2(%arg0: i32, %arg1: i32) -> (i32, i32, i32) {
    %c0_i32 = arith.constant 0 : i32
    %c0_i32_0 = arith.constant 0 : i32
    %c0_i32_1 = arith.constant 0 : i32
    return %arg0, %c0_i32, %c0_i32_0 : i32, i32, i32
  }
}

</mosaic_0001>

<llo_original>
// kernel: _data_loss_sum.1
$region0: #{_data_loss_sum.1}
  #allocation0 [shape = 'u32[]', space=smem, size = 0x4, offset = 0x4, fixed_abs, tag = 'smem constant byte address 0x4 - core index']
  #allocation1 [shape = 'u32[144,128]{1,0:T(1,128)}', space=vmem, size = 0x12000, scoped, tag = 'internal scratch']
  %s0 = inlined_call_operand.vmem [shape: f32[256,128], index: 0, kind: input, shape index: {}]
  %s1 = inlined_call_operand.vmem [shape: f32[256,128], index: 1, kind: input, shape index: {}]
  %s2 = inlined_call_operand.vmem [shape: f32[1,8,128], index: 2, kind: output, shape index: {}]
  %s3 = sld [smem:[#allocation0]]
  $region22: #{_data_loss_sum.1} parent=0
    _
  %s5 = ssub.s32 1, %s3
  %s6 = scalar_select 0, %s5, %s3
  // Predicated region
  $region2: #{_data_loss_sum.1} parent=0 // pred_check
    _
  $region3: #{_data_loss_sum.1} parent=0 // pred_check_branch
    %8 = sbr.rel (0) target = $region5
  $region4: #{_data_loss_sum.1} parent=0 // pred_region
    %s9 = sadd.s32 0, 0
    %s10 = smul.u32 32, %s9
    %p11 = scmp.lt.s32.totalorder %s10, 31
    %s12 = scalar_select %p11, %s10, 31
    %s13 = smul.addr %s12, 8
    %s14 = scalar_lea.vmem %s0, %s13
    %s15 = sadd.s32 0, 0
    %s16 = smul.u32 32, %s15
  $region5: #{_data_loss_sum.1} parent=0 // pred_fallthru
    _
  // Predicated region
  $region6: #{_data_loss_sum.1} parent=0 // pred_check
    _
  $region7: #{_data_loss_sum.1} parent=0 // pred_check_branch
    %18 = sbr.rel (0) target = $region9
  $region8: #{_data_loss_sum.1} parent=0 // pred_region
    %s19 = sadd.s32 0, 0
    %s20 = smul.u32 32, %s19
    %p21 = scmp.lt.s32.totalorder %s20, 31
    %s22 = scalar_select %p21, %s20, 31
    %s23 = smul.addr %s22, 8
    %s24 = scalar_lea.vmem %s1, %s23
    %s25 = sadd.s32 0, 0
    %s26 = smul.u32 32, %s25
  $region9: #{_data_loss_sum.1} parent=0 // pred_fallthru
    _
  %s27 = sadd.s32 0, 0
  %s28 = smul.u32 32, %s27
  %p29 = scmp.lt.s32.totalorder %s28, 31
  %s30 = scalar_select %p29, %s28, 31
  %s31 = smul.addr %s30, 8
  %s32 = scalar_lea.vmem %s0, %s31
  %s33 = sadd.s32 0, 0
  %s34 = smul.u32 32, %s33
  %p35 = scmp.lt.s32.totalorder %s34, 31
  %s36 = scalar_select %p35, %s34, 31
  %s37 = smul.addr %s36, 8
  %s38 = scalar_lea.vmem %s1, %s37
  %s39 = sadd.s32 0, 0
  %s40 = smul.u32 32, %s39
  %p41 = scmp.lt.s32.totalorder %s40, 31
  %s42 = scalar_select %p41, %s40, 31
  %s43 = smul.addr %s42, 8
  %s44 = scalar_lea.vmem %s0, %s43
  %s45 = sadd.s32 0, 0
  %s46 = smul.u32 32, %s45
  %s47 = sadd.s32 0, 0
  %s48 = smul.u32 32, %s47
  %p49 = scmp.lt.s32.totalorder %s48, 31
  %s50 = scalar_select %p49, %s48, 31
  %s51 = smul.addr %s50, 8
  %s52 = scalar_lea.vmem %s1, %s51
  %s53 = sadd.s32 0, 0
  %s54 = smul.u32 32, %s53
  %p55 = scmp.eq.s32.totalorder 0, 0
  // Predicated region
  $region10: #{_data_loss_sum.1} parent=0 // pred_check
    %p56 = pneg %p55
  $region11: #{_data_loss_sum.1} parent=0 // pred_check_branch
    %58 = sbr.rel (%p56) target = $region13
  $region12: #{_data_loss_sum.1} parent=0 // pred_region
    %59 = vst [vmem:[%s2] sm:$0xff] 0.0
  $region13: #{_data_loss_sum.1} parent=0 // pred_fallthru
    _
  %v60 = vld [vmem:[%s44] sm:$0xff]
  %v61 = vld [vmem:[%s44 + $0x8] sm:$0xff]
  %v62 = vld [vmem:[%s44 + $0x10] sm:$0xff]
  %v63 = vld [vmem:[%s44 + $0x18] sm:$0xff]
  %v64 = vld [vmem:[%s44 + $0x20] sm:$0xff]
  %v65 = vld [vmem:[%s44 + $0x28] sm:$0xff]
  %v66 = vld [vmem:[%s44 + $0x30] sm:$0xff]
  %v67 = vld [vmem:[%s44 + $0x38] sm:$0xff]
  %v68 = vld [vmem:[%s44 + $0x40] sm:$0xff]
  %v69 = vld [vmem:[%s44 + $0x48] sm:$0xff]
  %v70 = vld [vmem:[%s44 + $0x50] sm:$0xff]
  %v71 = vld [vmem:[%s44 + $0x58] sm:$0xff]
  %v72 = vld [vmem:[%s44 + $0x60] sm:$0xff]
  %v73 = vld [vmem:[%s44 + $0x68] sm:$0xff]
  %v74 = vld [vmem:[%s44 + $0x70] sm:$0xff]
  %v75 = vld [vmem:[%s44 + $0x78] sm:$0xff]
  %v76 = vld [vmem:[%s44 + $0x80] sm:$0xff]
  %v77 = vld [vmem:[%s44 + $0x88] sm:$0xff]
  %v78 = vld [vmem:[%s44 + $0x90] sm:$0xff]
  %v79 = vld [vmem:[%s44 + $0x98] sm:$0xff]
  %v80 = vld [vmem:[%s44 + $0xa0] sm:$0xff]
  %v81 = vld [vmem:[%s44 + $0xa8] sm:$0xff]
  %v82 = vld [vmem:[%s44 + $0xb0] sm:$0xff]
  %v83 = vld [vmem:[%s44 + $0xb8] sm:$0xff]
  %v84 = vld [vmem:[%s44 + $0xc0] sm:$0xff]
  %v85 = vld [vmem:[%s44 + $0xc8] sm:$0xff]
  %v86 = vld [vmem:[%s44 + $0xd0] sm:$0xff]
  %v87 = vld [vmem:[%s44 + $0xd8] sm:$0xff]
  %v88 = vld [vmem:[%s44 + $0xe0] sm:$0xff]
  %v89 = vld [vmem:[%s44 + $0xe8] sm:$0xff]
  %v90 = vld [vmem:[%s44 + $0xf0] sm:$0xff]
  %v91 = vld [vmem:[%s44 + $0xf8] sm:$0xff]
  %v92 = vld [vmem:[%s52] sm:$0xff]
  %v93 = vld [vmem:[%s52 + $0x8] sm:$0xff]
  %v94 = vld [vmem:[%s52 + $0x10] sm:$0xff]
  %v95 = vld [vmem:[%s52 + $0x18] sm:$0xff]
  %v96 = vld [vmem:[%s52 + $0x20] sm:$0xff]
  %v97 = vld [vmem:[%s52 + $0x28] sm:$0xff]
  %v98 = vld [vmem:[%s52 + $0x30] sm:$0xff]
  %v99 = vld [vmem:[%s52 + $0x38] sm:$0xff]
  %v100 = vld [vmem:[%s52 + $0x40] sm:$0xff]
  %v101 = vld [vmem:[%s52 + $0x48] sm:$0xff]
  %v102 = vld [vmem:[%s52 + $0x50] sm:$0xff]
  %v103 = vld [vmem:[%s52 + $0x58] sm:$0xff]
  %v104 = vld [vmem:[%s52 + $0x60] sm:$0xff]
  %v105 = vld [vmem:[%s52 + $0x68] sm:$0xff]
  %v106 = vld [vmem:[%s52 + $0x70] sm:$0xff]
  %v107 = vld [vmem:[%s52 + $0x78] sm:$0xff]
  %v108 = vld [vmem:[%s52 + $0x80] sm:$0xff]
  %v109 = vld [vmem:[%s52 + $0x88] sm:$0xff]
  %v110 = vld [vmem:[%s52 + $0x90] sm:$0xff]
  %v111 = vld [vmem:[%s52 + $0x98] sm:$0xff]
  %v112 = vld [vmem:[%s52 + $0xa0] sm:$0xff]
  %v113 = vld [vmem:[%s52 + $0xa8] sm:$0xff]
  %v114 = vld [vmem:[%s52 + $0xb0] sm:$0xff]
  %v115 = vld [vmem:[%s52 + $0xb8] sm:$0xff]
  %v116 = vld [vmem:[%s52 + $0xc0] sm:$0xff]
  %v117 = vld [vmem:[%s52 + $0xc8] sm:$0xff]
  %v118 = vld [vmem:[%s52 + $0xd0] sm:$0xff]
  %v119 = vld [vmem:[%s52 + $0xd8] sm:$0xff]
  %v120 = vld [vmem:[%s52 + $0xe0] sm:$0xff]
  %v121 = vld [vmem:[%s52 + $0xe8] sm:$0xff]
  %v122 = vld [vmem:[%s52 + $0xf0] sm:$0xff]
  %v123 = vld [vmem:[%s52 + $0xf8] sm:$0xff]
  %v124 = vsub.f32 %v60, %v92
  %v125 = vsub.f32 %v61, %v93
  %v126 = vsub.f32 %v62, %v94
  %v127 = vsub.f32 %v63, %v95
  %v128 = vsub.f32 %v64, %v96
  %v129 = vsub.f32 %v65, %v97
  %v130 = vsub.f32 %v66, %v98
  %v131 = vsub.f32 %v67, %v99
  %v132 = vsub.f32 %v68, %v100
  %v133 = vsub.f32 %v69, %v101
  %v134 = vsub.f32 %v70, %v102
  %v135 = vsub.f32 %v71, %v103
  %v136 = vsub.f32 %v72, %v104
  %v137 = vsub.f32 %v73, %v105
  %v138 = vsub.f32 %v74, %v106
  %v139 = vsub.f32 %v75, %v107
  %v140 = vsub.f32 %v76, %v108
  %v141 = vsub.f32 %v77, %v109
  %v142 = vsub.f32 %v78, %v110
  %v143 = vsub.f32 %v79, %v111
  %v144 = vsub.f32 %v80, %v112
  %v145 = vsub.f32 %v81, %v113
  %v146 = vsub.f32 %v82, %v114
  %v147 = vsub.f32 %v83, %v115
  %v148 = vsub.f32 %v84, %v116
  %v149 = vsub.f32 %v85, %v117
  %v150 = vsub.f32 %v86, %v118
  %v151 = vsub.f32 %v87, %v119
  %v152 = vsub.f32 %v88, %v120
  %v153 = vsub.f32 %v89, %v121
  %v154 = vsub.f32 %v90, %v122
  %v155 = vsub.f32 %v91, %v123
  %v156 = vmul.f32 %v124, %v124
  %v157 = vmul.f32 %v125, %v125
  %v158 = vmul.f32 %v126, %v126
  %v159 = vmul.f32 %v127, %v127
  %v160 = vmul.f32 %v128, %v128
  %v161 = vmul.f32 %v129, %v129
  %v162 = vmul.f32 %v130, %v130
  %v163 = vmul.f32 %v131, %v131
  %v164 = vmul.f32 %v132, %v132
  %v165 = vmul.f32 %v133, %v133
  %v166 = vmul.f32 %v134, %v134
  %v167 = vmul.f32 %v135, %v135
  %v168 = vmul.f32 %v136, %v136
  %v169 = vmul.f32 %v137, %v137
  %v170 = vmul.f32 %v138, %v138
  %v171 = vmul.f32 %v139, %v139
  %v172 = vmul.f32 %v140, %v140
  %v173 = vmul.f32 %v141, %v141
  %v174 = vmul.f32 %v142, %v142
  %v175 = vmul.f32 %v143, %v143
  %v176 = vmul.f32 %v144, %v144
  %v177 = vmul.f32 %v145, %v145
  %v178 = vmul.f32 %v146, %v146
  %v179 = vmul.f32 %v147, %v147
  %v180 = vmul.f32 %v148, %v148
  %v181 = vmul.f32 %v149, %v149
  %v182 = vmul.f32 %v150, %v150
  %v183 = vmul.f32 %v151, %v151
  %v184 = vmul.f32 %v152, %v152
  %v185 = vmul.f32 %v153, %v153
  %v186 = vmul.f32 %v154, %v154
  %v187 = vmul.f32 %v155, %v155
  %v188 = vld [vmem:[%s2] sm:$0xff]
  %v189 = vadd.f32 %v156, %v157
  %v190 = vadd.f32 %v189, %v158
  %v191 = vadd.f32 %v190, %v159
  %v192 = vadd.f32 %v191, %v160
  %v193 = vadd.f32 %v192, %v161
  %v194 = vadd.f32 %v193, %v162
  %v195 = vadd.f32 %v194, %v163
  %v196 = vadd.f32 %v195, %v164
  %v197 = vadd.f32 %v196, %v165
  %v198 = vadd.f32 %v197, %v166
  %v199 = vadd.f32 %v198, %v167
  %v200 = vadd.f32 %v199, %v168
  %v201 = vadd.f32 %v200, %v169
  %v202 = vadd.f32 %v201, %v170
  %v203 = vadd.f32 %v202, %v171
  %v204 = vadd.f32 %v203, %v172
  %v205 = vadd.f32 %v204, %v173
  %v206 = vadd.f32 %v205, %v174
  %v207 = vadd.f32 %v206, %v175
  %v208 = vadd.f32 %v207, %v176
  %v209 = vadd.f32 %v208, %v177
  %v210 = vadd.f32 %v209, %v178
  %v211 = vadd.f32 %v210, %v179
  %v212 = vadd.f32 %v211, %v180
  %v213 = vadd.f32 %v212, %v181
  %v214 = vadd.f32 %v213, %v182
  %v215 = vadd.f32 %v214, %v183
  %v216 = vadd.f32 %v215, %v184
  %v217 = vadd.f32 %v216, %v185
  %v218 = vadd.f32 %v217, %v186
  %v219 = vadd.f32 %v218, %v187
  %v220 = vadd.f32 %v188, %v219
  %221 = vst [vmem:[%s2] sm:$0xff] %v220
  // Predicated region
  $region14: #{_data_loss_sum.1} parent=0 // pred_check
    _
  $region15: #{_data_loss_sum.1} parent=0 // pred_check_branch
    %223 = sbr.rel (0) target = $region17
  $region16: #{_data_loss_sum.1} parent=0 // pred_region
    _
  $region17: #{_data_loss_sum.1} parent=0 // pred_fallthru
    _
  // Predicated region
  $region18: #{_data_loss_sum.1} parent=0 // pred_check
    _
  $region19: #{_data_loss_sum.1} parent=0 // pred_check_branch
    %225 = sbr.rel (0) target = $region21
  $region20: #{_data_loss_sum.1} parent=0 // pred_region
    _
  $region21: #{_data_loss_sum.1} parent=0 // pred_fallthru
    _

</llo_original>
